<compile_context>
chip_gen: v7x
topology: tpu7x:2x2x1
jax: 0.10.0
libtpu: 0.0.40
codegen_flags: <defaults>
</compile_context>

<pallas_src>
import functools

import jax
import jax.numpy as jnp
from jax import lax
from jax.experimental import pallas as pl
from jax.experimental.pallas import tpu as pltpu


def _round_up(x, m):
    return ((x + m - 1) // m) * m


def _tpu_vmem_bytes():
    try:
        return int(pltpu.get_tpu_info().vmem_capacity_bytes)
    except Exception:
        return 64 * 1024 * 1024   # conservative (v7x per-TensorCore VMEM)


def _pick_tiles(A, C, D_pad, itemsize, with_mask):
    """Largest row tile that fits VMEM, preferring >=2 row stripes (megacore)."""
    TC = min(512, _round_up(C, 128))
    vmem_phys = _tpu_vmem_bytes()
    budget = min(int(vmem_phys * 0.7), 96 * 1024 * 1024)

    def fits(ta):
        need = 2 * ta * D_pad * itemsize          # anchor tiles (double-buffered)
        need += 2 * D_pad * TC * itemsize         # contrast^T tiles (double-buffered)
        if with_mask:
            need += 2 * ta * TC                   # int8 mask tiles (double-buffered)
        need += 6 * ta * TC * 4                   # f32 per-tile temporaries
        need += 6 * ta * 4                        # accumulators + output
        return need <= budget

    A32 = _round_up(max(A, 1), 32)
    if A32 <= 256:
        ta = A32                                  # single row stripe, everything tiny
    else:
        ta = 256
        for cand in (1024, 512, 256):
            if 2 * cand <= A32 and fits(cand):    # keep >=2 stripes for 2 TCs (v7x)
                ta = cand
                break
        while ta > 128 and not fits(ta):
            ta //= 2

    vmem_limit = max(32 * 1024 * 1024,
                     min(int(vmem_phys * 0.8), 110 * 1024 * 1024))
    return ta, TC, vmem_limit


def _online_step(i, k, sim, pos_raw, colw, has_col_pad, ta, tc,
                 o_ref, m_sc, l_sc, s_sc, p_sc):
    """One flash-style online-LSE + positive-pair accumulation step."""
    @pl.when(k == 0)
    def _():
        m_sc[...] = jnp.full_like(m_sc, -jnp.inf)
        l_sc[...] = jnp.zeros_like(l_sc)
        s_sc[...] = jnp.zeros_like(s_sc)
        p_sc[...] = jnp.zeros_like(p_sc)

    m_prev = m_sc[...]                                        # [TA, 1]
    # Running max over the UNMASKED sim (incl. diagonal / padded cols): the shift
    # cancels exactly in s/p - m - log(l), and padded cols (sim=0) only raise m,
    # which is overflow-safe.  Matches the reference's full-row max.
    m_new = jnp.maximum(m_prev, jnp.max(sim, axis=1, keepdims=True))
    alpha = jnp.exp(m_prev - m_new)

    e = jnp.exp(sim - m_new)                                  # [TA, TC]
    pos_w = pos_raw

    # Padded contrast columns exist only in the last column tile and only when
    # C_pad > C (Python-static) -> gate both conditions.
    if has_col_pad:
        e, pos_w = lax.cond(
            k == pl.num_programs(1) - 1,
            lambda v: (v[0] * colw, v[1] * colw),
            lambda v: v,
            (e, pos_w))

    # Self-contrast (diagonal) exclusion: only tiles the global diagonal crosses
    # pay for the iota / compare / select work.
    diag_in_tile = jnp.logical_and(i * ta < (k + 1) * tc, k * tc < (i + 1) * ta)

    def _zero_diag(v):
        e_, p_ = v
        on_diag = (i * ta + lax.broadcasted_iota(jnp.int32, (ta, tc), 0)
                   == k * tc + lax.broadcasted_iota(jnp.int32, (ta, tc), 1))
        return jnp.where(on_diag, 0.0, e_), jnp.where(on_diag, 0.0, p_)

    e, pos_w = lax.cond(diag_in_tile, _zero_diag, lambda v: v, (e, pos_w))

    l_sc[...] = alpha * l_sc[...] + jnp.sum(e, axis=1, keepdims=True)
    s_sc[...] = s_sc[...] + jnp.sum(pos_w * sim, axis=1, keepdims=True)
    p_sc[...] = p_sc[...] + jnp.sum(pos_w, axis=1, keepdims=True)
    m_sc[...] = m_new

    @pl.when(k == pl.num_programs(1) - 1)
    def _():
        # mean_log_prob_pos = sum(pos*logits)/sum(pos) - log(denominator).
        # NOTE: rows with zero positives give NaN, matching PyTorch SupConLoss;
        # padded anchor rows are sliced off in the wrapper before the mean.
        o_ref[...] = s_sc[...] / p_sc[...] - m_sc[...] - jnp.log(l_sc[...])


def _supcon_ids_kernel(row_ids_ref, col_ids_ref, col_w_ref, a_ref, ct_ref, o_ref,
                       m_sc, l_sc, s_sc, p_sc, *, inv_temp, ta, tc, has_col_pad):
    i = pl.program_id(0)
    k = pl.program_id(1)

    # Canonical [TA,D] x [D,TC] MXU matmul (contrast pre-transposed in wrapper),
    # f32 accumulation; inv_temp applied once to the f32 sim tile.
    sim = jnp.dot(a_ref[...], ct_ref[...],
                  preferred_element_type=jnp.float32) * inv_temp

    # Positive mask from tiny id vectors: the compare broadcasts (TA,1)==(1,TC)
    # directly (no [TA,TC] int32 materialization).
    pos_raw = (row_ids_ref[...] == col_ids_ref[...]).astype(jnp.float32)

    colw = col_w_ref[...] if has_col_pad else None
    _online_step(i, k, sim, pos_raw, colw, has_col_pad, ta, tc,
                 o_ref, m_sc, l_sc, s_sc, p_sc)


def _supcon_mask_kernel(col_w_ref, a_ref, ct_ref, mask_ref, o_ref,
                        m_sc, l_sc, s_sc, p_sc, *, inv_temp, ta, tc, has_col_pad):
    i = pl.program_id(0)
    k = pl.program_id(1)

    sim = jnp.dot(a_ref[...], ct_ref[...],
                  preferred_element_type=jnp.float32) * inv_temp

    # int8 mask tile (4x less HBM than f32); padded rows/cols are already zero.
    pos_raw = mask_ref[...].astype(jnp.float32)

    colw = col_w_ref[...] if has_col_pad else None
    _online_step(i, k, sim, pos_raw, colw, has_col_pad, ta, tc,
                 o_ref, m_sc, l_sc, s_sc, p_sc)


def supcon_loss(features, labels=None, mask=None, *,
                temperature=10.0, contrast_mode='all', base_temperature=10.0,
                compute_dtype=jnp.bfloat16):
    """JAX/Pallas port of SupConLoss.forward (contrast_mode='all' or 'one').

    compute_dtype defaults to bfloat16 (f32 accumulation in-kernel); pass
    jnp.float32 (or None to keep the input dtype) for bit-closer results.
    """
    if features.ndim < 3:
        raise ValueError('`features` needs to be [bsz, n_views, ...]')
    if labels is not None and mask is not None:
        raise ValueError('Cannot define both `labels` and `mask`')

    bsz, n_views = features.shape[0], features.shape[1]
    feats = features.reshape(bsz, n_views, -1)
    dim = feats.shape[-1]

    contrast_count = n_views
    # torch.cat(torch.unbind(features, dim=1), dim=0) -> view-major [n_views*bsz, dim]
    contrast_feature = jnp.transpose(feats, (1, 0, 2)).reshape(n_views * bsz, dim)
    if contrast_mode == 'one':
        anchor_feature = feats[:, 0]
        anchor_count = 1
    elif contrast_mode == 'all':
        anchor_feature = contrast_feature
        anchor_count = contrast_count
    else:
        raise ValueError('Unknown mode: {}'.format(contrast_mode))

    # bf16 by default: halves the dominant HBM stream (the contrast tiles are
    # re-streamed A_pad/TA times) and runs the MXU at full rate on v6e/v7x.
    if compute_dtype is not None:
        anchor_feature = anchor_feature.astype(compute_dtype)
        contrast_feature = contrast_feature.astype(compute_dtype)
    itemsize = jnp.dtype(anchor_feature.dtype).itemsize

    A = anchor_count * bsz
    C = contrast_count * bsz
    D = dim
    D_pad = _round_up(D, 128)

    TA, TC, vmem_limit = _pick_tiles(A, C, D_pad, itemsize,
                                     with_mask=(mask is not None))
    A_pad = _round_up(A, TA)
    C_pad = _round_up(C, TC)
    has_col_pad = C_pad > C

    a = jnp.pad(anchor_feature, ((0, A_pad - A), (0, D_pad - D)))
    # One-time HBM-level transpose so the kernel sees [TA,D]x[D,TC] with no
    # per-tile transpose of the contrast block.
    ct = jnp.pad(contrast_feature, ((0, C_pad - C), (0, D_pad - D))).T

    # (1, C_pad) column-validity vector (only actually read when has_col_pad).
    col_w = (jnp.arange(C_pad, dtype=jnp.int32) < C).astype(jnp.float32)
    col_w = col_w.reshape(1, C_pad)

    grid = (A_pad // TA, C_pad // TC)
    out_shape = jax.ShapeDtypeStruct((A_pad, 1), jnp.float32)
    scratch_shapes = [pltpu.VMEM((TA, 1), jnp.float32)] * 4   # m, l, s, p
    compiler_params = pltpu.CompilerParams(
        dimension_semantics=("parallel", "arbitrary"),
        vmem_limit_bytes=int(vmem_limit))
    cost = pl.CostEstimate(
        flops=int(2 * A_pad * C_pad * D_pad),
        transcendentals=int(A_pad * C_pad + 2 * A_pad * grid[1]),
        bytes_accessed=int(A_pad * D_pad * itemsize
                           + C_pad * D_pad * itemsize * grid[0]
                           + (A_pad * C_pad if mask is not None else 0)
                           + A_pad * 4))

    common = dict(inv_temp=1.0 / float(temperature), ta=TA, tc=TC,
                  has_col_pad=has_col_pad)

    if mask is None:
        # SimCLR (eye) or supervised (labels): rebuild the positive mask per tile
        # from small per-row / per-column id vectors (no N^2 mask in HBM).
        if labels is None:
            base_ids = jnp.arange(bsz, dtype=jnp.int32)
        else:
            labels = jnp.asarray(labels).reshape(-1)
            if labels.shape[0] != bsz:
                raise ValueError('Num of labels does not match num of features')
            base_ids = labels.astype(jnp.int32)
        col_ids = jnp.tile(base_ids, contrast_count)            # [C]
        row_ids = col_ids[:A]                                   # 'all': == col_ids
        row_ids = jnp.pad(row_ids, (0, A_pad - A)).reshape(A_pad, 1)
        col_ids = jnp.pad(col_ids, (0, C_pad - C)).reshape(1, C_pad)

        kernel = functools.partial(_supcon_ids_kernel, **common)
        mlpp = pl.pallas_call(
            kernel,
            out_shape=out_shape,
            grid_spec=pltpu.PrefetchScalarGridSpec(
                num_scalar_prefetch=0,
                grid=grid,
                in_specs=[
                    pl.BlockSpec((TA, 1), lambda i, k: (i, 0)),       # row ids
                    pl.BlockSpec((1, TC), lambda i, k: (0, k)),       # col ids
                    pl.BlockSpec((1, TC), lambda i, k: (0, k)),       # col validity
                    pl.BlockSpec((TA, D_pad), lambda i, k: (i, 0)),   # anchor tile
                    pl.BlockSpec((D_pad, TC), lambda i, k: (0, k)),   # contrast^T tile
                ],
                out_specs=pl.BlockSpec((TA, 1), lambda i, k: (i, 0)),
                scratch_shapes=scratch_shapes),
            compiler_params=compiler_params,
            cost_estimate=cost,
        )(row_ids, col_ids, col_w, a, ct)
    else:
        # Explicit user mask: streamed as int8 tiles (assumes the documented
        # binary 0/1 mask).
        # TODO(synk): when bsz % TA == 0 and bsz % TC == 0 a modulo index_map into
        # the original [bsz,bsz] mask would avoid this O(A*C) int8 materialization.
        mask8 = jnp.asarray(mask).astype(jnp.int8)
        mask_tiled = jnp.tile(mask8, (anchor_count, contrast_count))
        mask_tiled = jnp.pad(mask_tiled, ((0, A_pad - A), (0, C_pad - C)))

        kernel = functools.partial(_supcon_mask_kernel, **common)
        mlpp = pl.pallas_call(
            kernel,
            out_shape=out_shape,
            grid_spec=pltpu.PrefetchScalarGridSpec(
                num_scalar_prefetch=0,
                grid=grid,
                in_specs=[
                    pl.BlockSpec((1, TC), lambda i, k: (0, k)),       # col validity
                    pl.BlockSpec((TA, D_pad), lambda i, k: (i, 0)),   # anchor tile
                    pl.BlockSpec((D_pad, TC), lambda i, k: (0, k)),   # contrast^T tile
                    pl.BlockSpec((TA, TC), lambda i, k: (i, k)),      # int8 mask tile
                ],
                out_specs=pl.BlockSpec((TA, 1), lambda i, k: (i, 0)),
                scratch_shapes=scratch_shapes),
            compiler_params=compiler_params,
            cost_estimate=cost,
        )(col_w, a, ct, mask_tiled)

    mean_log_prob_pos = mlpp[:A, 0]
    return -(float(temperature) / float(base_temperature)) * jnp.mean(mean_log_prob_pos)


def _supcon_loss_ref(features, labels=None, mask=None, *, temperature=10.0,
                     base_temperature=10.0, contrast_mode='all'):
    """Pure-JAX reference mirroring the PyTorch code (sanity check)."""
    bsz, n_views = features.shape[0], features.shape[1]
    feats = features.reshape(bsz, n_views, -1)
    dim = feats.shape[-1]
    if labels is None and mask is None:
        mask = jnp.eye(bsz, dtype=jnp.float32)
    elif labels is not None:
        labels = jnp.asarray(labels).reshape(-1, 1)
        mask = (labels == labels.T).astype(jnp.float32)
    else:
        mask = jnp.asarray(mask, jnp.float32)
    cf = jnp.transpose(feats, (1, 0, 2)).reshape(n_views * bsz, dim)
    if contrast_mode == 'one':
        af, anchor_count = feats[:, 0], 1
    else:
        af, anchor_count = cf, n_views
    adc = jnp.dot(af, cf.T) / temperature
    logits = adc - jnp.max(adc, axis=1, keepdims=True)
    A, C = anchor_count * bsz, n_views * bsz
    mask = jnp.tile(mask, (anchor_count, n_views))
    logits_mask = (jnp.arange(A)[:, None] != jnp.arange(C)[None, :]).astype(jnp.float32)
    mask = mask * logits_mask
    exp_logits = jnp.exp(logits) * logits_mask
    log_prob = logits - jnp.log(jnp.sum(exp_logits, axis=1, keepdims=True))
    mlpp = jnp.sum(mask * log_prob, axis=1) / jnp.sum(mask, axis=1)
    return -(temperature / base_temperature) * jnp.mean(mlpp)


def _check(name, got, want, tol):
    if not bool(jnp.allclose(got, want, rtol=tol, atol=tol)):
        raise AssertionError(f"{name} mismatch: kernel={got} ref={want}")


if __name__ == "__main__":
    key = jax.random.PRNGKey(0)
    bsz, n_views, dim = 4, 2, 32
    features = jax.random.normal(key, (bsz, n_views, dim), dtype=jnp.float32)
    features = features / jnp.linalg.norm(features, axis=-1, keepdims=True)

    # 1) SimCLR path (eye mask), f32 compute: tight check of the math.
    loss32 = jax.block_until_ready(supcon_loss(features, compute_dtype=jnp.float32))
    ref = _supcon_loss_ref(features)
    _check("SimCLR/f32", loss32, ref, 1e-4)

    # 2) SimCLR path, default bf16 compute (f32 accumulation): looser tolerance.
    loss_bf = jax.block_until_ready(supcon_loss(features))
    _check("SimCLR/bf16", loss_bf, ref, 2e-2)

    # 3) Supervised (labels) path, f32 compute.
    labels = jnp.array([0, 1, 0, 1], dtype=jnp.int32)
    loss_lbl = jax.block_until_ready(
        supcon_loss(features, labels=labels, compute_dtype=jnp.float32))
    ref_lbl = _supcon_loss_ref(features, labels=labels)
    _check("labels/f32", loss_lbl, ref_lbl, 1e-4)

    # 4) contrast_mode='one', f32 compute.
    loss_one = jax.block_until_ready(
        supcon_loss(features, labels=labels, contrast_mode='one',
                    compute_dtype=jnp.float32))
    ref_one = _supcon_loss_ref(features, labels=labels, contrast_mode='one')
    _check("one/f32", loss_one, ref_one, 1e-4)

    # 5) Explicit-mask path (int8-streamed mask tiles), default bf16 compute.
    m = (labels[:, None] == labels[None, :]).astype(jnp.float32)
    loss_m = jax.block_until_ready(supcon_loss(features, mask=m))
    _check("mask/bf16", loss_m, ref_lbl, 2e-2)

    print("KERNEL_OK")
</pallas_src>

<mosaic_0001>
module attributes {stable_mosaic.version = 11 : i64} {
  func.func @_supcon_ids_kernel(%arg0: i32, %arg1: i32, %arg2: memref<32x1xi32, #tpu.memory_space<vmem>>, %arg3: memref<1x128xi32, #tpu.memory_space<vmem>>, %arg4: memref<1x128xf32, #tpu.memory_space<vmem>>, %arg5: memref<32x128xf32, #tpu.memory_space<vmem>>, %arg6: memref<128x128xf32, #tpu.memory_space<vmem>>, %arg7: memref<32x1xf32, #tpu.memory_space<vmem>>, %arg8: memref<32x1xf32, #tpu.memory_space<vmem>>, %arg9: memref<32x1xf32, #tpu.memory_space<vmem>>, %arg10: memref<32x1xf32, #tpu.memory_space<vmem>>, %arg11: memref<32x1xf32, #tpu.memory_space<vmem>>) attributes {dimension_semantics = [#tpu.dimension_semantics<parallel>, #tpu.dimension_semantics<arbitrary>], iteration_bounds = array<i64: 1, 1>, scalar_prefetch = 0 : i64, scratch_operands = 4 : i64, tpu.core_type = #tpu.core_type<tc>, window_params = [{transform_indices = @transform_0, window_bounds = array<i64: 32, 1>}, {transform_indices = @transform_1, window_bounds = array<i64: 1, 128>}, {transform_indices = @transform_2, window_bounds = array<i64: 1, 128>}, {transform_indices = @transform_3, window_bounds = array<i64: 32, 128>}, {transform_indices = @transform_4, window_bounds = array<i64: 128, 128>}, {transform_indices = @transform_5, window_bounds = array<i64: 32, 1>}]} {
    %c0 = arith.constant 0 : index
    %c0_0 = arith.constant 0 : index
    %0 = vector.load %arg5[%c0, %c0_0] : memref<32x128xf32, #tpu.memory_space<vmem>>, vector<32x128xf32>
    %c0_1 = arith.constant 0 : index
    %c0_2 = arith.constant 0 : index
    %1 = vector.load %arg6[%c0_1, %c0_2] : memref<128x128xf32, #tpu.memory_space<vmem>>, vector<128x128xf32>
    %cst = arith.constant dense<0.000000e+00> : vector<32x128xf32>
    %2 = tpu.matmul %0, %1, %cst {dimension_numbers = #tpu.dot_dimension_numbers<[1], [0], [0], [1], [0, 0, 1, 1], [], []>} : vector<32x128xf32>, vector<128x128xf32>, vector<32x128xf32> -> vector<32x128xf32>
    %cst_3 = arith.constant 1.000000e-01 : f32
    %3 = vector.broadcast %cst_3 : f32 to vector<32x128xf32>
    %4 = arith.mulf %2, %3 : vector<32x128xf32>
    %c0_4 = arith.constant 0 : index
    %c0_5 = arith.constant 0 : index
    %5 = vector.load %arg2[%c0_4, %c0_5] : memref<32x1xi32, #tpu.memory_space<vmem>>, vector<32x1xi32>
    %c0_6 = arith.constant 0 : index
    %c0_7 = arith.constant 0 : index
    %6 = vector.load %arg3[%c0_6, %c0_7] : memref<1x128xi32, #tpu.memory_space<vmem>>, vector<1x128xi32>
    %7 = vector.broadcast %5 : vector<32x1xi32> to vector<32x128xi32>
    %8 = vector.broadcast %6 : vector<1x128xi32> to vector<32x128xi32>
    %9 = arith.cmpi eq, %7, %8 : vector<32x128xi32>
    %10 = arith.extui %9 : vector<32x128xi1> to vector<32x128xi32>
    %11 = arith.sitofp %10 : vector<32x128xi32> to vector<32x128xf32>
    %c0_8 = arith.constant 0 : index
    %c0_9 = arith.constant 0 : index
    %12 = vector.load %arg4[%c0_8, %c0_9] : memref<1x128xf32, #tpu.memory_space<vmem>>, vector<1x128xf32>
    %c0_i32 = arith.constant 0 : i32
    %13 = arith.cmpi eq, %arg1, %c0_i32 : i32
    %14 = arith.extui %13 : i1 to i32
    %c0_i32_10 = arith.constant 0 : i32
    %15 = arith.cmpi ne, %14, %c0_i32_10 : i32
    scf.if %15 {
      %cst_39 = arith.constant 0xFF800000 : f32
      %62 = vector.broadcast %cst_39 : f32 to vector<32x1xf32>
      %c0_40 = arith.constant 0 : index
      %c0_41 = arith.constant 0 : index
      %63 = vector.load %arg8[%c0_40, %c0_41] : memref<32x1xf32, #tpu.memory_space<vmem>>, vector<32x1xf32>
      tpu.vector_store %arg8[%c0_40, %c0_41], %62 {strides = array<i32>} : memref<32x1xf32, #tpu.memory_space<vmem>>, vector<32x1xf32>,
      %cst_42 = arith.constant 0.000000e+00 : f32
      %64 = vector.broadcast %cst_42 : f32 to vector<32x1xf32>
      %c0_43 = arith.constant 0 : index
      %c0_44 = arith.constant 0 : index
      %65 = vector.load %arg9[%c0_43, %c0_44] : memref<32x1xf32, #tpu.memory_space<vmem>>, vector<32x1xf32>
      tpu.vector_store %arg9[%c0_43, %c0_44], %64 {strides = array<i32>} : memref<32x1xf32, #tpu.memory_space<vmem>>, vector<32x1xf32>,
      %cst_45 = arith.constant 0.000000e+00 : f32
      %66 = vector.broadcast %cst_45 : f32 to vector<32x1xf32>
      %c0_46 = arith.constant 0 : index
      %c0_47 = arith.constant 0 : index
      %67 = vector.load %arg10[%c0_46, %c0_47] : memref<32x1xf32, #tpu.memory_space<vmem>>, vector<32x1xf32>
      tpu.vector_store %arg10[%c0_46, %c0_47], %66 {strides = array<i32>} : memref<32x1xf32, #tpu.memory_space<vmem>>, vector<32x1xf32>,
      %cst_48 = arith.constant 0.000000e+00 : f32
      %68 = vector.broadcast %cst_48 : f32 to vector<32x1xf32>
      %c0_49 = arith.constant 0 : index
      %c0_50 = arith.constant 0 : index
      %69 = vector.load %arg11[%c0_49, %c0_50] : memref<32x1xf32, #tpu.memory_space<vmem>>, vector<32x1xf32>
      tpu.vector_store %arg11[%c0_49, %c0_50], %68 {strides = array<i32>} : memref<32x1xf32, #tpu.memory_space<vmem>>, vector<32x1xf32>,
    } else {
    }
    %c0_11 = arith.constant 0 : index
    %c0_12 = arith.constant 0 : index
    %16 = vector.load %arg8[%c0_11, %c0_12] : memref<32x1xf32, #tpu.memory_space<vmem>>, vector<32x1xf32>
    %cst_13 = arith.constant dense<0xFF800000> : vector<32xf32>
    %17 = vector.multi_reduction <maximumf>, %4, %cst_13 [1] : vector<32x128xf32> to vector<32xf32>
    %18 = vector.shape_cast %17 : vector<32xf32> to vector<32x1xf32>
    %19 = arith.maximumf %16, %18 : vector<32x1xf32>
    %20 = arith.subf %16, %19 : vector<32x1xf32>
    %21 = math.exp %20 : vector<32x1xf32>
    %22 = vector.broadcast %19 : vector<32x1xf32> to vector<32x128xf32>
    %23 = arith.subf %4, %22 : vector<32x128xf32>
    %24 = math.exp %23 : vector<32x128xf32>
    %c0_i32_14 = arith.constant 0 : i32
    %25 = arith.cmpi eq, %arg1, %c0_i32_14 : i32
    %26 = arith.extui %25 : i1 to i32
    %c0_i32_15 = arith.constant 0 : i32
    %27 = arith.cmpi ne, %26, %c0_i32_15 : i32
    %28:2 = scf.if %27 -> (vector<32x128xf32>, vector<32x128xf32>) {
      %62 = vector.broadcast %12 : vector<1x128xf32> to vector<32x128xf32>
      %63 = arith.mulf %24, %62 : vector<32x128xf32>
      %64 = vector.broadcast %12 : vector<1x128xf32> to vector<32x128xf32>
      %65 = arith.mulf %11, %64 : vector<32x128xf32>
      scf.yield %63, %65 : vector<32x128xf32>, vector<32x128xf32>
    } else {
      scf.yield %24, %11 : vector<32x128xf32>, vector<32x128xf32>
    }
    %c32_i32 = arith.constant 32 : i32
    %29 = arith.muli %arg0, %c32_i32 : i32
    %c1_i32 = arith.constant 1 : i32
    %30 = arith.addi %arg1, %c1_i32 : i32
    %c128_i32 = arith.constant 128 : i32
    %31 = arith.muli %30, %c128_i32 : i32
    %32 = arith.cmpi slt, %29, %31 : i32
    %c128_i32_16 = arith.constant 128 : i32
    %33 = arith.muli %arg1, %c128_i32_16 : i32
    %c1_i32_17 = arith.constant 1 : i32
    %34 = arith.addi %arg0, %c1_i32_17 : i32
    %c32_i32_18 = arith.constant 32 : i32
    %35 = arith.muli %34, %c32_i32_18 : i32
    %36 = arith.cmpi slt, %33, %35 : i32
    %37 = arith.andi %32, %36 : i1
    %38 = arith.extui %37 : i1 to i32
    %c0_i32_19 = arith.constant 0 : i32
    %39 = arith.cmpi ne, %38, %c0_i32_19 : i32
    %40:2 = scf.if %39 -> (vector<32x128xf32>, vector<32x128xf32>) {
      %c32_i32_39 = arith.constant 32 : i32
      %62 = arith.muli %arg0, %c32_i32_39 : i32
      %63 = tpu.iota {dimensions = array<i32: 0>} : vector<32x128xi32>
      %64 = vector.broadcast %62 : i32 to vector<32x128xi32>
      %65 = arith.addi %64, %63 : vector<32x128xi32>
      %c128_i32_40 = arith.constant 128 : i32
      %66 = arith.muli %arg1, %c128_i32_40 : i32
      %67 = tpu.iota {dimensions = array<i32: 1>} : vector<32x128xi32>
      %68 = vector.broadcast %66 : i32 to vector<32x128xi32>
      %69 = arith.addi %68, %67 : vector<32x128xi32>
      %70 = arith.cmpi eq, %65, %69 : vector<32x128xi32>
      %cst_41 = arith.constant 0.000000e+00 : f32
      %71 = vector.broadcast %cst_41 : f32 to vector<32x128xf32>
      %72 = arith.select %70, %71, %28#0 : vector<32x128xi1>, vector<32x128xf32>
      %cst_42 = arith.constant 0.000000e+00 : f32
      %73 = vector.broadcast %cst_42 : f32 to vector<32x128xf32>
      %74 = arith.select %70, %73, %28#1 : vector<32x128xi1>, vector<32x128xf32>
      scf.yield %72, %74 : vector<32x128xf32>, vector<32x128xf32>
    } else {
      scf.yield %28#0, %28#1 : vector<32x128xf32>, vector<32x128xf32>
    }
    %c0_20 = arith.constant 0 : index
    %c0_21 = arith.constant 0 : index
    %41 = vector.load %arg9[%c0_20, %c0_21] : memref<32x1xf32, #tpu.memory_space<vmem>>, vector<32x1xf32>
    %42 = arith.mulf %21, %41 : vector<32x1xf32>
    %cst_22 = arith.constant dense<0.000000e+00> : vector<32xf32>
    %43 = vector.multi_reduction <add>, %40#0, %cst_22 [1] : vector<32x128xf32> to vector<32xf32>
    %44 = vector.shape_cast %43 : vector<32xf32> to vector<32x1xf32>
    %45 = arith.addf %42, %44 : vector<32x1xf32>
    %c0_23 = arith.constant 0 : index
    %c0_24 = arith.constant 0 : index
    %46 = vector.load %arg9[%c0_23, %c0_24] : memref<32x1xf32, #tpu.memory_space<vmem>>, vector<32x1xf32>
    tpu.vector_store %arg9[%c0_23, %c0_24], %45 {strides = array<i32>} : memref<32x1xf32, #tpu.memory_space<vmem>>, vector<32x1xf32>,
    %c0_25 = arith.constant 0 : index
    %c0_26 = arith.constant 0 : index
    %47 = vector.load %arg10[%c0_25, %c0_26] : memref<32x1xf32, #tpu.memory_space<vmem>>, vector<32x1xf32>
    %48 = arith.mulf %40#1, %4 : vector<32x128xf32>
    %cst_27 = arith.constant dense<0.000000e+00> : vector<32xf32>
    %49 = vector.multi_reduction <add>, %48, %cst_27 [1] : vector<32x128xf32> to vector<32xf32>
    %50 = vector.shape_cast %49 : vector<32xf32> to vector<32x1xf32>
    %51 = arith.addf %47, %50 : vector<32x1xf32>
    %c0_28 = arith.constant 0 : index
    %c0_29 = arith.constant 0 : index
    %52 = vector.load %arg10[%c0_28, %c0_29] : memref<32x1xf32, #tpu.memory_space<vmem>>, vector<32x1xf32>
    tpu.vector_store %arg10[%c0_28, %c0_29], %51 {strides = array<i32>} : memref<32x1xf32, #tpu.memory_space<vmem>>, vector<32x1xf32>,
    %c0_30 = arith.constant 0 : index
    %c0_31 = arith.constant 0 : index
    %53 = vector.load %arg11[%c0_30, %c0_31] : memref<32x1xf32, #tpu.memory_space<vmem>>, vector<32x1xf32>
    %cst_32 = arith.constant dense<0.000000e+00> : vector<32xf32>
    %54 = vector.multi_reduction <add>, %40#1, %cst_32 [1] : vector<32x128xf32> to vector<32xf32>
    %55 = vector.shape_cast %54 : vector<32xf32> to vector<32x1xf32>
    %56 = arith.addf %53, %55 : vector<32x1xf32>
    %c0_33 = arith.constant 0 : index
    %c0_34 = arith.constant 0 : index
    %57 = vector.load %arg11[%c0_33, %c0_34] : memref<32x1xf32, #tpu.memory_space<vmem>>, vector<32x1xf32>
    tpu.vector_store %arg11[%c0_33, %c0_34], %56 {strides = array<i32>} : memref<32x1xf32, #tpu.memory_space<vmem>>, vector<32x1xf32>,
    %c0_35 = arith.constant 0 : index
    %c0_36 = arith.constant 0 : index
    %58 = vector.load %arg8[%c0_35, %c0_36] : memref<32x1xf32, #tpu.memory_space<vmem>>, vector<32x1xf32>
    tpu.vector_store %arg8[%c0_35, %c0_36], %19 {strides = array<i32>} : memref<32x1xf32, #tpu.memory_space<vmem>>, vector<32x1xf32>,
    %c0_i32_37 = arith.constant 0 : i32
    %59 = arith.cmpi eq, %arg1, %c0_i32_37 : i32
    %60 = arith.extui %59 : i1 to i32
    %c0_i32_38 = arith.constant 0 : i32
    %61 = arith.cmpi ne, %60, %c0_i32_38 : i32
    scf.if %61 {
      %c0_39 = arith.constant 0 : index
      %c0_40 = arith.constant 0 : index
      %62 = vector.load %arg10[%c0_39, %c0_40] : memref<32x1xf32, #tpu.memory_space<vmem>>, vector<32x1xf32>
      %c0_41 = arith.constant 0 : index
      %c0_42 = arith.constant 0 : index
      %63 = vector.load %arg11[%c0_41, %c0_42] : memref<32x1xf32, #tpu.memory_space<vmem>>, vector<32x1xf32>
      %64 = arith.divf %62, %63 : vector<32x1xf32>
      %c0_43 = arith.constant 0 : index
      %c0_44 = arith.constant 0 : index
      %65 = vector.load %arg8[%c0_43, %c0_44] : memref<32x1xf32, #tpu.memory_space<vmem>>, vector<32x1xf32>
      %66 = arith.subf %64, %65 : vector<32x1xf32>
      %c0_45 = arith.constant 0 : index
      %c0_46 = arith.constant 0 : index
      %67 = vector.load %arg9[%c0_45, %c0_46] : memref<32x1xf32, #tpu.memory_space<vmem>>, vector<32x1xf32>
      %68 = math.log %67 : vector<32x1xf32>
      %69 = arith.subf %66, %68 : vector<32x1xf32>
      %c0_47 = arith.constant 0 : index
      %c0_48 = arith.constant 0 : index
      %70 = vector.load %arg7[%c0_47, %c0_48] : memref<32x1xf32, #tpu.memory_space<vmem>>, vector<32x1xf32>
      tpu.vector_store %arg7[%c0_47, %c0_48], %69 {strides = array<i32>} : memref<32x1xf32, #tpu.memory_space<vmem>>, vector<32x1xf32>,
    } else {
    }
    return
  }
  func.func @transform_0(%arg0: i32, %arg1: i32) -> (i32, i32) {
    %c0_i32 = arith.constant 0 : i32
    %c0_i32_0 = arith.constant 0 : i32
    return %arg0, %c0_i32 : i32, i32
  }
  func.func @transform_1(%arg0: i32, %arg1: i32) -> (i32, i32) {
    %c0_i32 = arith.constant 0 : i32
    %c0_i32_0 = arith.constant 0 : i32
    return %c0_i32, %arg1 : i32, i32
  }
  func.func @transform_2(%arg0: i32, %arg1: i32) -> (i32, i32) {
    %c0_i32 = arith.constant 0 : i32
    %c0_i32_0 = arith.constant 0 : i32
    return %c0_i32, %arg1 : i32, i32
  }
  func.func @transform_3(%arg0: i32, %arg1: i32) -> (i32, i32) {
    %c0_i32 = arith.constant 0 : i32
    %c0_i32_0 = arith.constant 0 : i32
    return %arg0, %c0_i32 : i32, i32
  }
  func.func @transform_4(%arg0: i32, %arg1: i32) -> (i32, i32) {
    %c0_i32 = arith.constant 0 : i32
    %c0_i32_0 = arith.constant 0 : i32
    return %c0_i32, %arg1 : i32, i32
  }
  func.func @transform_5(%arg0: i32, %arg1: i32) -> (i32, i32) {
    %c0_i32 = arith.constant 0 : i32
    %c0_i32_0 = arith.constant 0 : i32
    return %arg0, %c0_i32 : i32, i32
  }
}

</mosaic_0001>

<llo_original>
// kernel: tpu_custom_call.1
$region0: #{tpu_custom_call.1}
  #allocation0 [shape = 'u32[]', space=smem, size = 0x4, offset = 0x4, fixed_abs, tag = 'smem constant byte address 0x4 - core index']
  #allocation1 [shape = 'u32[144,128]{1,0:T(1,128)}', space=vmem, size = 0x12000, scoped, tag = 'internal scratch']
  #allocation2 [shape = 'f32[32,1]{1,0:T(8,128)}', space=vmem, size = 0x4000, scoped, tag = 'scratch operand']
  #allocation3 [shape = 'f32[32,1]{1,0:T(8,128)}', space=vmem, size = 0x4000, scoped, tag = 'scratch operand']
  #allocation4 [shape = 'f32[32,1]{1,0:T(8,128)}', space=vmem, size = 0x4000, scoped, tag = 'scratch operand']
  #allocation5 [shape = 'f32[32,1]{1,0:T(8,128)}', space=vmem, size = 0x4000, scoped, tag = 'scratch operand']
  %s0 = inlined_call_operand.vmem [shape: s32[32,1], index: 0, kind: input, shape index: {}]
  %s1 = inlined_call_operand.vmem [shape: s32[1,128], index: 1, kind: input, shape index: {}]
  %s2 = inlined_call_operand.vmem [shape: f32[1,128], index: 2, kind: input, shape index: {}]
  %s3 = inlined_call_operand.vmem [shape: f32[32,128], index: 3, kind: input, shape index: {}]
  %s4 = inlined_call_operand.hbm [shape: f32[128,128], index: 4, kind: input, shape index: {}]
  %s5 = inlined_call_operand.vmem [shape: f32[32,1], index: 5, kind: output, shape index: {}]
  %s6 = sld [smem:[#allocation0]]
  $region58: #{tpu_custom_call.1} parent=0
    _
  %s8 = ssub.s32 1, %s6
  %s9 = scalar_select 0, %s8, %s6
  $region1: #{tpu_custom_call.1} parent=0
    #allocation6 [shape = 'u8[65536]{0}', space=vmem, size = 0x10000, scoped, tag = 'input window, operand 4, single buffered']
    #allocation7 [shape = 's32[1]{0}', space=sflag, size = 0x4, scoped, tag = 'scoped memory for tpu_custom_call.1']
    %10 = vsyncpa [#allocation7], 0
    // Predicated region
    $region2: #{tpu_custom_call.1} parent=1 // pred_check
      _
    $region3: #{tpu_custom_call.1} parent=1 // pred_check_branch
      %12 = sbr.rel (0) target = $region5
    $region4: #{tpu_custom_call.1} parent=1 // pred_region
      _
    $region5: #{tpu_custom_call.1} parent=1 // pred_fallthru
      _
    // Predicated region
    $region6: #{tpu_custom_call.1} parent=1 // pred_check
      _
    $region7: #{tpu_custom_call.1} parent=1 // pred_check_branch
      %14 = sbr.rel (0) target = $region9
    $region8: #{tpu_custom_call.1} parent=1 // pred_region
      _
    $region9: #{tpu_custom_call.1} parent=1 // pred_fallthru
      _
    // Predicated region
    $region10: #{tpu_custom_call.1} parent=1 // pred_check
      _
    $region11: #{tpu_custom_call.1} parent=1 // pred_check_branch
      %16 = sbr.rel (0) target = $region13
    $region12: #{tpu_custom_call.1} parent=1 // pred_region
      _
    $region13: #{tpu_custom_call.1} parent=1 // pred_fallthru
      _
    // Predicated region
    $region14: #{tpu_custom_call.1} parent=1 // pred_check
      _
    $region15: #{tpu_custom_call.1} parent=1 // pred_check_branch
      %18 = sbr.rel (0) target = $region17
    $region16: #{tpu_custom_call.1} parent=1 // pred_region
      _
    $region17: #{tpu_custom_call.1} parent=1 // pred_fallthru
      _
    // Predicated region
    $region18: #{tpu_custom_call.1} parent=1 // pred_check
      _
    $region19: #{tpu_custom_call.1} parent=1 // pred_check_branch
      %20 = sbr.rel (0) target = $region21
    $region20: #{tpu_custom_call.1} parent=1 // pred_region
      %s22 = ssub.s32 2048, 2048
      %23 = vsyncadd [#allocation7], %s22
      %s24 = sshll.u32 [#allocation6], 4
      %s25 = int_to_ptr.vmem [resolvable:$true] %s24
      %30 = dma.hbm_to_vmem [thread:$0]  %s4, 2048, %s25, [#allocation7], 128, 128, 8
    $region21: #{tpu_custom_call.1} parent=1 // pred_fallthru
      _
    // Predicated region
    $region22: #{tpu_custom_call.1} parent=1 // pred_check
      _
    $region23: #{tpu_custom_call.1} parent=1 // pred_check_branch
      %32 = sbr.rel (0) target = $region25
    $region24: #{tpu_custom_call.1} parent=1 // pred_region
      %33 = dma.done [#allocation7], 2048
    $region25: #{tpu_custom_call.1} parent=1 // pred_fallthru
      _
    %v34 = vld [vmem:[%s3] sm:$0xff]
    %v35 = vld [vmem:[%s3 + $0x8] sm:$0xff]
    %v36 = vld [vmem:[%s3 + $0x10] sm:$0xff]
    %v37 = vld [vmem:[%s3 + $0x18] sm:$0xff]
    %v38 = vld [vmem:[#allocation6] sm:$0xff]
    %v39 = vld [vmem:[#allocation6 + $0x8] sm:$0xff]
    %v40 = vld [vmem:[#allocation6 + $0x10] sm:$0xff]
    %v41 = vld [vmem:[#allocation6 + $0x18] sm:$0xff]
    %v42 = vld [vmem:[#allocation6 + $0x20] sm:$0xff]
    %v43 = vld [vmem:[#allocation6 + $0x28] sm:$0xff]
    %v44 = vld [vmem:[#allocation6 + $0x30] sm:$0xff]
    %v45 = vld [vmem:[#allocation6 + $0x38] sm:$0xff]
    %v46 = vld [vmem:[#allocation6 + $0x40] sm:$0xff]
    %v47 = vld [vmem:[#allocation6 + $0x48] sm:$0xff]
    %v48 = vld [vmem:[#allocation6 + $0x50] sm:$0xff]
    %v49 = vld [vmem:[#allocation6 + $0x58] sm:$0xff]
    %v50 = vld [vmem:[#allocation6 + $0x60] sm:$0xff]
    %v51 = vld [vmem:[#allocation6 + $0x68] sm:$0xff]
    %v52 = vld [vmem:[#allocation6 + $0x70] sm:$0xff]
    %v53 = vld [vmem:[#allocation6 + $0x78] sm:$0xff]
    %54 = vmatprep.subr.mxu0 0.0
    %55 = vmatpush1.msra.mxu0 %v38
    %56 = vmatprep.subr.mxu0 0.0
    %57 = vmatpush1.msra.mxu0 %v39
    %58 = vmatprep.subr.mxu0 0.0
    %59 = vmatpush1.msra.mxu0 %v40
    %60 = vmatprep.subr.mxu0 0.0
    %61 = vmatpush1.msra.mxu0 %v41
    %62 = vmatprep.subr.mxu0 0.0
    %63 = vmatpush1.msra.mxu0 %v42
    %64 = vmatprep.subr.mxu0 0.0
    %65 = vmatpush1.msra.mxu0 %v43
    %66 = vmatprep.subr.mxu0 0.0
    %67 = vmatpush1.msra.mxu0 %v44
    %68 = vmatprep.subr.mxu0 0.0
    %69 = vmatpush1.msra.mxu0 %v45
    %70 = vmatprep.subr.mxu0 0.0
    %71 = vmatpush1.msra.mxu0 %v46
    %72 = vmatprep.subr.mxu0 0.0
    %73 = vmatpush1.msra.mxu0 %v47
    %74 = vmatprep.subr.mxu0 0.0
    %75 = vmatpush1.msra.mxu0 %v48
    %76 = vmatprep.subr.mxu0 0.0
    %77 = vmatpush1.msra.mxu0 %v49
    %78 = vmatprep.subr.mxu0 0.0
    %79 = vmatpush1.msra.mxu0 %v50
    %80 = vmatprep.subr.mxu0 0.0
    %81 = vmatpush1.msra.mxu0 %v51
    %82 = vmatprep.subr.mxu0 0.0
    %83 = vmatpush1.msra.mxu0 %v52
    %84 = vmatprep.subr.mxu0 0.0
    %85 = vmatpush1.msra.mxu0 %v53
    %86 = vmatprep.subr.mxu0 0.0
    %87 = vmatpush1.msra.mxu0 0.0
    %88 = vmatprep.subr.mxu0 0.0
    %89 = vmatpush1.msra.mxu0 0.0
    %90 = vmatprep.subr.mxu0 0.0
    %91 = vmatpush1.msra.mxu0 0.0
    %92 = vmatprep.subr.mxu0 0.0
    %93 = vmatpush1.msra.mxu0 0.0
    %94 = vmatprep.subr.mxu0 0.0
    %95 = vmatpush1.msra.mxu0 0.0
    %96 = vmatprep.subr.mxu0 0.0
    %97 = vmatpush1.msra.mxu0 0.0
    %98 = vmatprep.subr.mxu0 0.0
    %99 = vmatpush1.msra.mxu0 0.0
    %100 = vmatprep.subr.mxu0 0.0
    %101 = vmatpush1.msra.mxu0 0.0
    %102 = vmatprep.subr.mxu0 0.0
    %103 = vmatpush1.msra.mxu0 0.0
    %104 = vmatprep.subr.mxu0 0.0
    %105 = vmatpush1.msra.mxu0 0.0
    %106 = vmatprep.subr.mxu0 0.0
    %107 = vmatpush1.msra.mxu0 0.0
    %108 = vmatprep.subr.mxu0 0.0
    %109 = vmatpush1.msra.mxu0 0.0
    %110 = vmatprep.subr.mxu0 0.0
    %111 = vmatpush1.msra.mxu0 0.0
    %112 = vmatprep.subr.mxu0 0.0
    %113 = vmatpush1.msra.mxu0 0.0
    %114 = vmatprep.subr.mxu0 0.0
    %115 = vmatpush1.msra.mxu0 0.0
    %116 = vmatprep.subr.mxu0 0.0
    %117 = vmatpush1.msra.mxu0 0.0
    %118 = vmatprep.mubr.f32.mxu0 0.0
    %119 = vmatmul.mubr.f32.gmra.mrb[0].mxu0 %v34
    %v120 = vpop.f32.mrb[0].mxu0
    %v121 = vadd.f32 0.0, %v120
    %v122 = vpop.f32.mrb[0].mxu0
    %123 = vmatprep.mubr.f32.mxu0 0.0
    %124 = vmatmul.mubr.f32.gmra.mrb[0].mxu0 %v35
    %v125 = vpop.f32.mrb[0].mxu0
    %v126 = vadd.f32 0.0, %v125
    %v127 = vpop.f32.mrb[0].mxu0
    %128 = vmatprep.mubr.f32.mxu0 0.0
    %129 = vmatmul.mubr.f32.gmra.mrb[0].mxu0 %v36
    %v130 = vpop.f32.mrb[0].mxu0
    %v131 = vadd.f32 0.0, %v130
    %v132 = vpop.f32.mrb[0].mxu0
    %133 = vmatprep.mubr.f32.mxu0 0.0
    %134 = vmatmul.mubr.f32.gmra.mrb[0].mxu0 %v37
    %v135 = vpop.f32.mrb[0].mxu0
    %v136 = vadd.f32 0.0, %v135
    %v137 = vpop.f32.mrb[0].mxu0
    %138 = vdwg.mxu0
    %v139 = vmul.f32 %v121, 0.1
    %v140 = vmul.f32 %v126, 0.1
    %v141 = vmul.f32 %v131, 0.1
    %v142 = vmul.f32 %v136, 0.1
    %v143 = vld [vmem:[%s0] sm:$0xff]
    %v144 = vld [vmem:[%s0 + $0x8] sm:$0xff]
    %v145 = vld [vmem:[%s0 + $0x10] sm:$0xff]
    %v146 = vld [vmem:[%s0 + $0x18] sm:$0xff]
    %v147 = vld [vmem:[%s1] sm:$0x1]
    %148 = vset.pattern.permute.xlu0 0
    %149 = vperm.xlu0 %148, %v143
    %v150 = vpop.permute.xlu0 %149
    %151 = vset.pattern.permute.xlu0 0
    %152 = vperm.xlu0 %151, %v144
    %v153 = vpop.permute.xlu0 %152
    %154 = vset.pattern.permute.xlu0 0
    %155 = vperm.xlu0 %154, %v145
    %v156 = vpop.permute.xlu0 %155
    %157 = vset.pattern.permute.xlu0 0
    %158 = vperm.xlu0 %157, %v146
    %v159 = vpop.permute.xlu0 %158
    %v160 = vlaneseq
    %v161 = vshrl.u32 %v160, 7
    %v162 = vsub.s32 0, %v161
    %v163 = vrot.slane %v147, %v162
    %vm164 = vcmp.eq.s32.totalorder %v150, %v163
    %vm165 = vcmp.eq.s32.totalorder %v153, %v163
    %vm166 = vcmp.eq.s32.totalorder %v156, %v163
    %vm167 = vcmp.eq.s32.totalorder %v159, %v163
    %v168 = vsel %vm164, 1, 0
    %v169 = vsel %vm165, 1, 0
    %v170 = vsel %vm166, 1, 0
    %v171 = vsel %vm167, 1, 0
    %v172 = vcvt.s32.f32 %v168
    %v173 = vcvt.s32.f32 %v169
    %v174 = vcvt.s32.f32 %v170
    %v175 = vcvt.s32.f32 %v171
    %v176 = vld [vmem:[%s2] sm:$0x1]
    %p177 = scmp.eq.s32.totalorder 0, 0
    // Predicated region
    $region26: #{tpu_custom_call.1} parent=1 // pred_check
      %p178 = pneg %p177
    $region27: #{tpu_custom_call.1} parent=1 // pred_check_branch
      %180 = sbr.rel (%p178) target = $region29
    $region28: #{tpu_custom_call.1} parent=1 // pred_region
      %vm181 = vcmask 7168
      %182 = vst.msk [vmem:[#allocation2] sm:$0xff] %vm181, -inf
      %183 = vst.msk [vmem:[#allocation2 + $0x8] sm:$0xff] %vm181, -inf
      %184 = vst.msk [vmem:[#allocation2 + $0x10] sm:$0xff] %vm181, -inf
      %185 = vst.msk [vmem:[#allocation2 + $0x18] sm:$0xff] %vm181, -inf
      %186 = vst.msk [vmem:[#allocation3] sm:$0xff] %vm181, 0.0
      %187 = vst.msk [vmem:[#allocation3 + $0x8] sm:$0xff] %vm181, 0.0
      %188 = vst.msk [vmem:[#allocation3 + $0x10] sm:$0xff] %vm181, 0.0
      %189 = vst.msk [vmem:[#allocation3 + $0x18] sm:$0xff] %vm181, 0.0
      %190 = vst.msk [vmem:[#allocation4] sm:$0xff] %vm181, 0.0
      %191 = vst.msk [vmem:[#allocation4 + $0x8] sm:$0xff] %vm181, 0.0
      %192 = vst.msk [vmem:[#allocation4 + $0x10] sm:$0xff] %vm181, 0.0
      %193 = vst.msk [vmem:[#allocation4 + $0x18] sm:$0xff] %vm181, 0.0
      %194 = vst.msk [vmem:[#allocation5] sm:$0xff] %vm181, 0.0
      %195 = vst.msk [vmem:[#allocation5 + $0x8] sm:$0xff] %vm181, 0.0
      %196 = vst.msk [vmem:[#allocation5 + $0x10] sm:$0xff] %vm181, 0.0
      %197 = vst.msk [vmem:[#allocation5 + $0x18] sm:$0xff] %vm181, 0.0
    $region29: #{tpu_custom_call.1} parent=1 // pred_fallthru
      _
    %v198 = vld [vmem:[#allocation2] sm:$0xff]
    %v199 = vld [vmem:[#allocation2 + $0x8] sm:$0xff]
    %v200 = vld [vmem:[#allocation2 + $0x10] sm:$0xff]
    %v201 = vld [vmem:[#allocation2 + $0x18] sm:$0xff]
    %202 = vmax.xlane.f32.xlu0 %v139
    %v203 = vpop.xlane.xlu0 %202
    %204 = vmax.xlane.f32.xlu0 %v140
    %v205 = vpop.xlane.xlu0 %204
    %206 = vmax.xlane.f32.xlu0 %v141
    %v207 = vpop.xlane.xlu0 %206
    %208 = vmax.xlane.f32.xlu0 %v142
    %v209 = vpop.xlane.xlu0 %208
    %v210 = vmax.f32 %v198, %v203
    %v211 = vmax.f32 %v199, %v205
    %v212 = vmax.f32 %v200, %v207
    %v213 = vmax.f32 %v201, %v209
    %v214 = vsub.f32 %v198, %v210
    %v215 = vsub.f32 %v199, %v211
    %v216 = vsub.f32 %v200, %v212
    %v217 = vsub.f32 %v201, %v213
    %v218 = vmul.f32 %v214, 1.442695
    %v219 = vpow.pop %v218
    %v220 = vmul.f32 %v215, 1.442695
    %v221 = vpow.pop %v220
    %v222 = vmul.f32 %v216, 1.442695
    %v223 = vpow.pop %v222
    %v224 = vmul.f32 %v217, 1.442695
    %v225 = vpow.pop %v224
    %227 = vset.pattern.permute.xlu0 0
    %228 = vperm.xlu0 %227, %v210
    %v229 = vpop.permute.xlu0 %228
    %232 = vset.pattern.permute.xlu0 0
    %233 = vperm.xlu0 %232, %v211
    %v234 = vpop.permute.xlu0 %233
    %237 = vset.pattern.permute.xlu0 0
    %238 = vperm.xlu0 %237, %v212
    %v239 = vpop.permute.xlu0 %238
    %242 = vset.pattern.permute.xlu0 0
    %243 = vperm.xlu0 %242, %v213
    %v244 = vpop.permute.xlu0 %243
    %v246 = vsub.f32 %v139, %v229
    %v247 = vsub.f32 %v140, %v234
    %v248 = vsub.f32 %v141, %v239
    %v249 = vsub.f32 %v142, %v244
    %v250 = vmul.f32 %v246, 1.442695
    %v251 = vpow.pop %v250
    %v252 = vmul.f32 %v247, 1.442695
    %v253 = vpow.pop %v252
    %v254 = vmul.f32 %v248, 1.442695
    %v255 = vpow.pop %v254
    %v256 = vmul.f32 %v249, 1.442695
    %v257 = vpow.pop %v256
    // Predicated region
    $region30: #{tpu_custom_call.1} parent=1 // pred_check
      %p258 = pneg %p177
    $region31: #{tpu_custom_call.1} parent=1 // pred_check_branch
      %260 = sbr.rel (%p258) target = $region33
    $region32: #{tpu_custom_call.1} parent=1 // pred_region
      %v262 = vlaneseq
      %v263 = vshrl.u32 %v262, 7
      %v264 = vsub.s32 0, %v263
      %v265 = vrot.slane %v176, %v264
      %v267 = vmul.f32 %v251, %v265
      %v268 = vmul.f32 %v253, %v265
      %v269 = vmul.f32 %v255, %v265
      %v270 = vmul.f32 %v257, %v265
      %v271 = vmul.f32 %v172, %v265
      %v272 = vmul.f32 %v173, %v265
      %v273 = vmul.f32 %v174, %v265
      %v274 = vmul.f32 %v175, %v265
    $region33: #{tpu_custom_call.1} parent=1 // pred_fallthru
      %v275 = vphi 0, %v267
      %v276 = vphi 0, %v268
      %v277 = vphi 0, %v269
      %v278 = vphi 0, %v270
      %v279 = vphi 0, %v271
      %v280 = vphi 0, %v272
      %v281 = vphi 0, %v273
      %v282 = vphi 0, %v274
    %p283 = pneg %p177
    // Predicated region
    $region34: #{tpu_custom_call.1} parent=1 // pred_check
      _
    $region35: #{tpu_custom_call.1} parent=1 // pred_check_branch
      %285 = sbr.rel (%p177) target = $region37
    $region36: #{tpu_custom_call.1} parent=1 // pred_region
      _
    $region37: #{tpu_custom_call.1} parent=1 // pred_fallthru
      %v286 = vphi %v275, %v251
      %v287 = vphi %v276, %v253
      %v288 = vphi %v277, %v255
      %v289 = vphi %v278, %v257
      %v290 = vphi %v279, %v172
      %v291 = vphi %v280, %v173
      %v292 = vphi %v281, %v174
      %v293 = vphi %v282, %v175
    %s294 = smul.u32 0, 32
    %s295 = sadd.s32 0, 1
    %s296 = smul.u32 %s295, 128
    %p297 = scmp.lt.s32.totalorder %s294, %s296
    %s298 = smul.u32 0, 128
    %s299 = sadd.s32 0, 1
    %s300 = smul.u32 %s299, 32
    %p301 = scmp.lt.s32.totalorder %s298, %s300
    %p302 = pnand %p297, %p301
    %p303 = pneg %p302
    // Predicated region
    $region38: #{tpu_custom_call.1} parent=1 // pred_check
      _
    $region39: #{tpu_custom_call.1} parent=1 // pred_check_branch
      %305 = sbr.rel (%p302) target = $region41
    $region40: #{tpu_custom_call.1} parent=1 // pred_region
      %v306 = vlaneseq
      %v307 = vshrl.u32 %v306, 7
      %v308 = vadd.s32 %v307, 8
      %v309 = vadd.s32 %v307, 16
      %v310 = vadd.s32 %v307, 24
      %v311 = vstv %s294
      %v312 = vadd.s32 %v311, %v307
      %v313 = vadd.s32 %v311, %v308
      %v314 = vadd.s32 %v311, %v309
      %v315 = vadd.s32 %v311, %v310
      %v316 = vlaneseq
      %v317 = vand.u32 %v316, 127
      %v318 = vstv %s298
      %v319 = vadd.s32 %v318, %v317
      %vm320 = vcmp.eq.s32.totalorder %v312, %v319
      %vm321 = vcmp.eq.s32.totalorder %v313, %v319
      %vm322 = vcmp.eq.s32.totalorder %v314, %v319
      %vm323 = vcmp.eq.s32.totalorder %v315, %v319
      %v324 = vsel %vm320, 0.0, %v286
      %v325 = vsel %vm321, 0.0, %v287
      %v326 = vsel %vm322, 0.0, %v288
      %v327 = vsel %vm323, 0.0, %v289
      %v328 = vsel %vm320, 0.0, %v290
      %v329 = vsel %vm321, 0.0, %v291
      %v330 = vsel %vm322, 0.0, %v292
      %v331 = vsel %vm323, 0.0, %v293
    $region41: #{tpu_custom_call.1} parent=1 // pred_fallthru
      %v332 = vphi 0, %v324
      %v333 = vphi 0, %v325
      %v334 = vphi 0, %v326
      %v335 = vphi 0, %v327
      %v336 = vphi 0, %v328
      %v337 = vphi 0, %v329
      %v338 = vphi 0, %v330
      %v339 = vphi 0, %v331
    // Predicated region
    $region42: #{tpu_custom_call.1} parent=1 // pred_check
      %p340 = pneg %p302
    $region43: #{tpu_custom_call.1} parent=1 // pred_check_branch
      %342 = sbr.rel (%p340) target = $region45
    $region44: #{tpu_custom_call.1} parent=1 // pred_region
      _
    $region45: #{tpu_custom_call.1} parent=1 // pred_fallthru
      %v343 = vphi %v332, %v286
      %v344 = vphi %v333, %v287
      %v345 = vphi %v334, %v288
      %v346 = vphi %v335, %v289
      %v347 = vphi %v336, %v290
      %v348 = vphi %v337, %v291
      %v349 = vphi %v338, %v292
      %v350 = vphi %v339, %v293
    %v351 = vld [vmem:[#allocation3] sm:$0xff]
    %v352 = vld [vmem:[#allocation3 + $0x8] sm:$0xff]
    %v353 = vld [vmem:[#allocation3 + $0x10] sm:$0xff]
    %v354 = vld [vmem:[#allocation3 + $0x18] sm:$0xff]
    %v355 = vmul.f32 %v219, %v351
    %v356 = vmul.f32 %v221, %v352
    %v357 = vmul.f32 %v223, %v353
    %v358 = vmul.f32 %v225, %v354
    %359 = vadd.xlane.f32.xlu0 %v343
    %v360 = vpop.xlane.xlu0 %359
    %361 = vadd.xlane.f32.xlu0 %v344
    %v362 = vpop.xlane.xlu0 %361
    %363 = vadd.xlane.f32.xlu0 %v345
    %v364 = vpop.xlane.xlu0 %363
    %365 = vadd.xlane.f32.xlu0 %v346
    %v366 = vpop.xlane.xlu0 %365
    %v367 = vadd.f32 %v355, %v360
    %v368 = vadd.f32 %v356, %v362
    %v369 = vadd.f32 %v357, %v364
    %v370 = vadd.f32 %v358, %v366
    %vm371 = vcmask 7168
    %372 = vst.msk [vmem:[#allocation3] sm:$0xff] %vm371, %v367
    %373 = vst.msk [vmem:[#allocation3 + $0x8] sm:$0xff] %vm371, %v368
    %374 = vst.msk [vmem:[#allocation3 + $0x10] sm:$0xff] %vm371, %v369
    %375 = vst.msk [vmem:[#allocation3 + $0x18] sm:$0xff] %vm371, %v370
    %v376 = vld [vmem:[#allocation4] sm:$0xff]
    %v377 = vld [vmem:[#allocation4 + $0x8] sm:$0xff]
    %v378 = vld [vmem:[#allocation4 + $0x10] sm:$0xff]
    %v379 = vld [vmem:[#allocation4 + $0x18] sm:$0xff]
    %v380 = vmul.f32 %v347, %v139
    %v381 = vmul.f32 %v348, %v140
    %v382 = vmul.f32 %v349, %v141
    %v383 = vmul.f32 %v350, %v142
    %384 = vadd.xlane.f32.xlu0 %v380
    %v385 = vpop.xlane.xlu0 %384
    %386 = vadd.xlane.f32.xlu0 %v381
    %v387 = vpop.xlane.xlu0 %386
    %388 = vadd.xlane.f32.xlu0 %v382
    %v389 = vpop.xlane.xlu0 %388
    %390 = vadd.xlane.f32.xlu0 %v383
    %v391 = vpop.xlane.xlu0 %390
    %v392 = vadd.f32 %v376, %v385
    %v393 = vadd.f32 %v377, %v387
    %v394 = vadd.f32 %v378, %v389
    %v395 = vadd.f32 %v379, %v391
    %396 = vst.msk [vmem:[#allocation4] sm:$0xff] %vm371, %v392
    %397 = vst.msk [vmem:[#allocation4 + $0x8] sm:$0xff] %vm371, %v393
    %398 = vst.msk [vmem:[#allocation4 + $0x10] sm:$0xff] %vm371, %v394
    %399 = vst.msk [vmem:[#allocation4 + $0x18] sm:$0xff] %vm371, %v395
    %v400 = vld [vmem:[#allocation5] sm:$0xff]
    %v401 = vld [vmem:[#allocation5 + $0x8] sm:$0xff]
    %v402 = vld [vmem:[#allocation5 + $0x10] sm:$0xff]
    %v403 = vld [vmem:[#allocation5 + $0x18] sm:$0xff]
    %404 = vadd.xlane.f32.xlu0 %v347
    %v405 = vpop.xlane.xlu0 %404
    %406 = vadd.xlane.f32.xlu0 %v348
    %v407 = vpop.xlane.xlu0 %406
    %408 = vadd.xlane.f32.xlu0 %v349
    %v409 = vpop.xlane.xlu0 %408
    %410 = vadd.xlane.f32.xlu0 %v350
    %v411 = vpop.xlane.xlu0 %410
    %v412 = vadd.f32 %v400, %v405
    %v413 = vadd.f32 %v401, %v407
    %v414 = vadd.f32 %v402, %v409
    %v415 = vadd.f32 %v403, %v411
    %416 = vst.msk [vmem:[#allocation5] sm:$0xff] %vm371, %v412
    %417 = vst.msk [vmem:[#allocation5 + $0x8] sm:$0xff] %vm371, %v413
    %418 = vst.msk [vmem:[#allocation5 + $0x10] sm:$0xff] %vm371, %v414
    %419 = vst.msk [vmem:[#allocation5 + $0x18] sm:$0xff] %vm371, %v415
    %420 = vst.msk [vmem:[#allocation2] sm:$0xff] %vm371, %v210
    %421 = vst.msk [vmem:[#allocation2 + $0x8] sm:$0xff] %vm371, %v211
    %422 = vst.msk [vmem:[#allocation2 + $0x10] sm:$0xff] %vm371, %v212
    %423 = vst.msk [vmem:[#allocation2 + $0x18] sm:$0xff] %vm371, %v213
    // Predicated region
    $region46: #{tpu_custom_call.1} parent=1 // pred_check
      %p424 = pneg %p177
    $region47: #{tpu_custom_call.1} parent=1 // pred_check_branch
      %426 = sbr.rel (%p424) target = $region49
    $region48: #{tpu_custom_call.1} parent=1 // pred_region
      %v427 = vld [vmem:[#allocation4] sm:$0xff]
      %v428 = vld [vmem:[#allocation4 + $0x8] sm:$0xff]
      %v429 = vld [vmem:[#allocation4 + $0x10] sm:$0xff]
      %v430 = vld [vmem:[#allocation4 + $0x18] sm:$0xff]
      %v431 = vld [vmem:[#allocation5] sm:$0xff]
      %v432 = vld [vmem:[#allocation5 + $0x8] sm:$0xff]
      %v433 = vld [vmem:[#allocation5 + $0x10] sm:$0xff]
      %v434 = vld [vmem:[#allocation5 + $0x18] sm:$0xff]
      %v435 = vrcp.pop %v431
      %v436 = vmul.f32 %v427, %v435
      %v437 = vrcp.pop %v432
      %v438 = vmul.f32 %v428, %v437
      %v439 = vrcp.pop %v433
      %v440 = vmul.f32 %v429, %v439
      %v441 = vrcp.pop %v434
      %v442 = vmul.f32 %v430, %v441
      %v443 = vld [vmem:[#allocation2] sm:$0xff]
      %v444 = vld [vmem:[#allocation2 + $0x8] sm:$0xff]
      %v445 = vld [vmem:[#allocation2 + $0x10] sm:$0xff]
      %v446 = vld [vmem:[#allocation2 + $0x18] sm:$0xff]
      %v447 = vsub.f32 %v436, %v443
      %v448 = vsub.f32 %v438, %v444
      %v449 = vsub.f32 %v440, %v445
      %v450 = vsub.f32 %v442, %v446
      %v451 = vld [vmem:[#allocation3] sm:$0xff]
      %v452 = vld [vmem:[#allocation3 + $0x8] sm:$0xff]
      %v453 = vld [vmem:[#allocation3 + $0x10] sm:$0xff]
      %v454 = vld [vmem:[#allocation3 + $0x18] sm:$0xff]
      %v455 = vlog2.pop %v451
      %v456 = vmul.f32 %v455, 0.6931472
      %v457 = vlog2.pop %v452
      %v458 = vmul.f32 %v457, 0.6931472
      %v459 = vlog2.pop %v453
      %v460 = vmul.f32 %v459, 0.6931472
      %v461 = vlog2.pop %v454
      %v462 = vmul.f32 %v461, 0.6931472
      %v463 = vsub.f32 %v447, %v456
      %v464 = vsub.f32 %v448, %v458
      %v465 = vsub.f32 %v449, %v460
      %v466 = vsub.f32 %v450, %v462
      %467 = vst.msk [vmem:[%s5] sm:$0xff] %vm371, %v463
      %468 = vst.msk [vmem:[%s5 + $0x8] sm:$0xff] %vm371, %v464
      %469 = vst.msk [vmem:[%s5 + $0x10] sm:$0xff] %vm371, %v465
      %470 = vst.msk [vmem:[%s5 + $0x18] sm:$0xff] %vm371, %v466
    $region49: #{tpu_custom_call.1} parent=1 // pred_fallthru
      _
    // Predicated region
    $region50: #{tpu_custom_call.1} parent=1 // pred_check
      _
    $region51: #{tpu_custom_call.1} parent=1 // pred_check_branch
      %472 = sbr.rel (0) target = $region53
    $region52: #{tpu_custom_call.1} parent=1 // pred_region
      _
    $region53: #{tpu_custom_call.1} parent=1 // pred_fallthru
      _
    // Predicated region
    $region54: #{tpu_custom_call.1} parent=1 // pred_check
      _
    $region55: #{tpu_custom_call.1} parent=1 // pred_check_branch
      %474 = sbr.rel (0) target = $region57
    $region56: #{tpu_custom_call.1} parent=1 // pred_region
      _
    $region57: #{tpu_custom_call.1} parent=1 // pred_fallthru
      _
    %475 = vsyncpa [#allocation7], 1

</llo_original>
